<compile_context>
chip_gen: v7x
topology: tpu7x:2x2x1
jax: 0.10.0
libtpu: 0.0.40
codegen_flags: <defaults>
</compile_context>

<pallas_src>
import jax
import jax.numpy as jnp
from jax.experimental import pallas as pl
from jax.experimental.pallas import tpu as pltpu

_LANE = 128
_COLS = 1024          # lane-dense slab width (multiple of 128)
_BLOCK_ROWS = 512     # ~2 MiB f32 per block; ~8 MiB resident w/ double buffering


def _round_up(a: int, b: int) -> int:
    return ((a + b - 1) // b) * b


def _linreg_kernel(params_ref, x_ref, o_ref):
    # params_ref lives in SMEM: params_ref[0] = weight, params_ref[1] = bias.
    # Cast once to the compute dtype so bf16 inputs stay bf16 on the VPU.
    w = params_ref[0].astype(x_ref.dtype)
    b = params_ref[1].astype(x_ref.dtype)
    o_ref[...] = (w * x_ref[...] + b).astype(o_ref.dtype)


def linear_regression_forward(x: jnp.ndarray,
                              weight: jnp.ndarray,
                              bias: jnp.ndarray) -> jnp.ndarray:
    """Computes weight * x + bias elementwise (weight/bias are scalars).

    Accepts any input shape/dtype; internally flattens to a lane-dense
    (rows, 1024) slab, tiles over rows, and reshapes back.
    """
    orig_shape = x.shape
    dtype = x.dtype
    n = x.size

    params = jnp.concatenate(
        [weight.reshape(1), bias.reshape(1)]).astype(jnp.float32)

    # Lane-dense 2-D layout: rows a multiple of 8, cols a multiple of 128.
    rows = _round_up(pl.cdiv(n, _COLS), 8)
    tile_rows = min(_BLOCK_ROWS, rows)
    rows = _round_up(rows, tile_rows)
    grid = rows // tile_rows

    padded_n = rows * _COLS
    x_flat = x.reshape(-1)
    if padded_n != n:
        x_flat = jnp.pad(x_flat, (0, padded_n - n))
    x2d = x_flat.reshape(rows, _COLS)

    y2d = pl.pallas_call(
        _linreg_kernel,
        out_shape=jax.ShapeDtypeStruct((rows, _COLS), dtype),
        grid_spec=pl.GridSpec(
            grid=(grid,),
            in_specs=[
                pl.BlockSpec(memory_space=pltpu.SMEM),              # scalars
                pl.BlockSpec((tile_rows, _COLS), lambda i: (i, 0)),  # x tile
            ],
            out_specs=pl.BlockSpec((tile_rows, _COLS), lambda i: (i, 0)),
        ),
        compiler_params=pltpu.CompilerParams(
            dimension_semantics=("parallel",),
            vmem_limit_bytes=32 * 1024 * 1024,
        ),
    )(params, x2d)

    return y2d.reshape(-1)[:n].reshape(orig_shape)


if __name__ == "__main__":
    key = jax.random.PRNGKey(0)
    k_x, k_w, k_b, k_x2 = jax.random.split(key, 4)

    # Deterministic "randn"-style params (match nn.Parameter(torch.randn(1))).
    weight = jax.random.normal(k_w, (1,), dtype=jnp.float32)
    bias = jax.random.normal(k_b, (1,), dtype=jnp.float32)

    # Small demo input (one vreg).
    x = jax.random.normal(k_x, (8, 128), dtype=jnp.float32)
    y = jax.block_until_ready(linear_regression_forward(x, weight, bias))
    y_ref = weight[0] * x + bias[0]
    assert jnp.allclose(y, y_ref, atol=1e-6, rtol=1e-6), "mismatch (small)"

    # Larger, non-lane-aligned shape: exercises padding + multi-step tiled grid.
    x2 = jax.random.normal(k_x2, (2048, 384), dtype=jnp.float32)
    y2 = jax.block_until_ready(linear_regression_forward(x2, weight, bias))
    y2_ref = weight[0] * x2 + bias[0]
    assert jnp.allclose(y2, y2_ref, atol=1e-6, rtol=1e-6), "mismatch (tiled)"

    print("KERNEL_OK")
</pallas_src>

<mosaic_0001>
module attributes {stable_mosaic.version = 11 : i64} {
  func.func @_linreg_kernel(%arg0: i32, %arg1: memref<2xf32, #tpu.memory_space<smem>>, %arg2: memref<8x1024xf32, #tpu.memory_space<vmem>>, %arg3: memref<8x1024xf32, #tpu.memory_space<vmem>>) attributes {dimension_semantics = [#tpu.dimension_semantics<parallel>], iteration_bounds = array<i64: 1>, scalar_prefetch = 0 : i64, scratch_operands = 0 : i64, tpu.core_type = #tpu.core_type<tc>, window_params = [{transform_indices = @transform_0, window_bounds = array<i64: 2>}, {transform_indices = @transform_1, window_bounds = array<i64: 8, 1024>}, {transform_indices = @transform_2, window_bounds = array<i64: 8, 1024>}]} {
    %c0 = arith.constant 0 : index
    %0 = memref.load %arg1[%c0] : memref<2xf32, #tpu.memory_space<smem>>
    %c1 = arith.constant 1 : index
    %1 = memref.load %arg1[%c1] : memref<2xf32, #tpu.memory_space<smem>>
    %c0_0 = arith.constant 0 : index
    %c0_1 = arith.constant 0 : index
    %2 = vector.load %arg2[%c0_0, %c0_1] : memref<8x1024xf32, #tpu.memory_space<vmem>>, vector<8x1024xf32>
    %3 = vector.broadcast %0 : f32 to vector<8x1024xf32>
    %4 = arith.mulf %3, %2 : vector<8x1024xf32>
    %5 = vector.broadcast %1 : f32 to vector<8x1024xf32>
    %6 = arith.addf %4, %5 : vector<8x1024xf32>
    %c0_2 = arith.constant 0 : index
    %c0_3 = arith.constant 0 : index
    %7 = vector.load %arg3[%c0_2, %c0_3] : memref<8x1024xf32, #tpu.memory_space<vmem>>, vector<8x1024xf32>
    tpu.vector_store %arg3[%c0_2, %c0_3], %6 {strides = array<i32>} : memref<8x1024xf32, #tpu.memory_space<vmem>>, vector<8x1024xf32>,
    return
  }
  func.func @transform_0(%arg0: i32) -> i32 {
    %c0_i32 = arith.constant 0 : i32
    %c0_i32_0 = arith.constant 0 : i32
    return %c0_i32 : i32
  }
  func.func @transform_1(%arg0: i32) -> (i32, i32) {
    %c0_i32 = arith.constant 0 : i32
    %c0_i32_0 = arith.constant 0 : i32
    return %arg0, %c0_i32 : i32, i32
  }
  func.func @transform_2(%arg0: i32) -> (i32, i32) {
    %c0_i32 = arith.constant 0 : i32
    %c0_i32_0 = arith.constant 0 : i32
    return %arg0, %c0_i32 : i32, i32
  }
}

</mosaic_0001>

<llo_original>
// kernel: tpu_custom_call.1
$region0: #{tpu_custom_call.1}
  #allocation0 [shape = 'u32[]', space=smem, size = 0x4, offset = 0x4, fixed_abs, tag = 'smem constant byte address 0x4 - core index']
  #allocation1 [shape = 'u32[144,128]{1,0:T(1,128)}', space=vmem, size = 0x12000, scoped, tag = 'internal scratch']
  %s0 = inlined_call_operand.hbm [shape: f32[2], index: 0, kind: input, shape index: {}]
  %s1 = inlined_call_operand.hbm [shape: f32[8,1024], index: 1, kind: input, shape index: {}]
  %s2 = inlined_call_operand.hbm [shape: f32[8,1024], index: 2, kind: output, shape index: {}]
  %s3 = sld [smem:[#allocation0]]
  $region26: #{tpu_custom_call.1} parent=0
    _
  %s5 = ssub.s32 1, %s3
  %s6 = scalar_select 0, %s5, %s3
  $region1: #{tpu_custom_call.1} parent=0
    #allocation2 [shape = 'u8[512]{0}', space=smem, size = 0x200, scoped, tag = 'input window, operand 0, single buffered']
    #allocation3 [shape = 's32[1]{0}', space=sflag, size = 0x4, scoped, tag = 'scoped memory for tpu_custom_call.1']
    #allocation4 [shape = 's32[1]{0}', space=sflag, size = 0x4, scoped, tag = 'scoped memory for tpu_custom_call.1']
    #allocation5 [shape = 's32[1]{0}', space=sflag, size = 0x4, scoped, tag = 'scoped memory for tpu_custom_call.1']
    #allocation6 [shape = 'u8[32768]{0}', space=vmem, size = 0x8000, scoped, tag = 'input window, operand 1, single buffered']
    #allocation7 [shape = 'u8[32768]{0}', space=vmem, size = 0x8000, scoped, tag = 'output window, operand 0, single buffered']
    %7 = vsyncpa [#allocation5], 0
    %8 = vsyncpa [#allocation3], 0
    %9 = vsyncpa [#allocation4], 0
    // Predicated region
    $region2: #{tpu_custom_call.1} parent=1 // pred_check
      _
    $region3: #{tpu_custom_call.1} parent=1 // pred_check_branch
      %11 = sbr.rel (0) target = $region5
    $region4: #{tpu_custom_call.1} parent=1 // pred_region
      %s13 = ssub.s32 16, 16
      %14 = vsyncadd [#allocation5], %s13
      %17 = dma.hbm_to_smem %s0, 16, [#allocation2], [#allocation5]
    $region5: #{tpu_custom_call.1} parent=1 // pred_fallthru
      _
    // Predicated region
    $region6: #{tpu_custom_call.1} parent=1 // pred_check
      _
    $region7: #{tpu_custom_call.1} parent=1 // pred_check_branch
      %19 = sbr.rel (0) target = $region9
    $region8: #{tpu_custom_call.1} parent=1 // pred_region
      %s21 = ssub.s32 1024, 1024
      %22 = vsyncadd [#allocation3], %s21
      %s24 = sshll.u32 [#allocation6], 4
      %s25 = int_to_ptr.vmem [resolvable:$true] %s24
      %27 = dma.hbm_to_vmem [thread:$0]  %s1, 1024, %s25, [#allocation3]
    $region9: #{tpu_custom_call.1} parent=1 // pred_fallthru
      _
    // Predicated region
    $region10: #{tpu_custom_call.1} parent=1 // pred_check
      _
    $region11: #{tpu_custom_call.1} parent=1 // pred_check_branch
      %29 = sbr.rel (0) target = $region13
    $region12: #{tpu_custom_call.1} parent=1 // pred_region
      %30 = dma.done [#allocation5], 16
    $region13: #{tpu_custom_call.1} parent=1 // pred_fallthru
      _
    // Predicated region
    $region14: #{tpu_custom_call.1} parent=1 // pred_check
      _
    $region15: #{tpu_custom_call.1} parent=1 // pred_check_branch
      %32 = sbr.rel (0) target = $region17
    $region16: #{tpu_custom_call.1} parent=1 // pred_region
      %33 = dma.done [#allocation3], 1024
    $region17: #{tpu_custom_call.1} parent=1 // pred_fallthru
      _
    %34 = sfence
    %s35 = sld [smem:[#allocation2]]
    %s36 = sld [smem:[#allocation2 + $0x1]]
    %v37 = vld [vmem:[#allocation6] sm:$0xff]
    %v38 = vld [vmem:[#allocation6 + $0x8] sm:$0xff]
    %v39 = vld [vmem:[#allocation6 + $0x10] sm:$0xff]
    %v40 = vld [vmem:[#allocation6 + $0x18] sm:$0xff]
    %v41 = vld [vmem:[#allocation6 + $0x20] sm:$0xff]
    %v42 = vld [vmem:[#allocation6 + $0x28] sm:$0xff]
    %v43 = vld [vmem:[#allocation6 + $0x30] sm:$0xff]
    %v44 = vld [vmem:[#allocation6 + $0x38] sm:$0xff]
    %v45 = vstv %s35
    %v46 = vmul.f32 %v45, %v37
    %v47 = vmul.f32 %v45, %v38
    %v48 = vmul.f32 %v45, %v39
    %v49 = vmul.f32 %v45, %v40
    %v50 = vmul.f32 %v45, %v41
    %v51 = vmul.f32 %v45, %v42
    %v52 = vmul.f32 %v45, %v43
    %v53 = vmul.f32 %v45, %v44
    %v54 = vstv %s36
    %v55 = vadd.f32 %v46, %v54
    %v56 = vadd.f32 %v47, %v54
    %v57 = vadd.f32 %v48, %v54
    %v58 = vadd.f32 %v49, %v54
    %v59 = vadd.f32 %v50, %v54
    %v60 = vadd.f32 %v51, %v54
    %v61 = vadd.f32 %v52, %v54
    %v62 = vadd.f32 %v53, %v54
    %63 = vst [vmem:[#allocation7] sm:$0xff] %v55
    %64 = vst [vmem:[#allocation7 + $0x8] sm:$0xff] %v56
    %65 = vst [vmem:[#allocation7 + $0x10] sm:$0xff] %v57
    %66 = vst [vmem:[#allocation7 + $0x18] sm:$0xff] %v58
    %67 = vst [vmem:[#allocation7 + $0x20] sm:$0xff] %v59
    %68 = vst [vmem:[#allocation7 + $0x28] sm:$0xff] %v60
    %69 = vst [vmem:[#allocation7 + $0x30] sm:$0xff] %v61
    %70 = vst [vmem:[#allocation7 + $0x38] sm:$0xff] %v62
    // Predicated region
    $region18: #{tpu_custom_call.1} parent=1 // pred_check
      _
    $region19: #{tpu_custom_call.1} parent=1 // pred_check_branch
      %72 = sbr.rel (0) target = $region21
    $region20: #{tpu_custom_call.1} parent=1 // pred_region
      %s74 = ssub.s32 1024, 1024
      %75 = vsyncadd [#allocation4], %s74
      %s77 = sshll.u32 [#allocation7], 4
      %s78 = int_to_ptr.vmem [resolvable:$true] %s77
      %80 = dma.vmem_to_hbm [thread:$0]  %s78, 1024, %s2, [#allocation4]
    $region21: #{tpu_custom_call.1} parent=1 // pred_fallthru
      _
    // Predicated region
    $region22: #{tpu_custom_call.1} parent=1 // pred_check
      _
    $region23: #{tpu_custom_call.1} parent=1 // pred_check_branch
      %82 = sbr.rel (0) target = $region25
    $region24: #{tpu_custom_call.1} parent=1 // pred_region
      %83 = dma.done [#allocation4], 1024
    $region25: #{tpu_custom_call.1} parent=1 // pred_fallthru
      _
    %84 = vsyncpa [#allocation3], 1
    %85 = vsyncpa [#allocation4], 1
    %86 = vsyncpa [#allocation5], 1

</llo_original>
